<compile_context>
chip_gen: v7x
topology: tpu7x:2x2x1
jax: 0.10.0
libtpu: 0.0.40
codegen_flags: <defaults>
</compile_context>

<pallas_src>
import functools

import jax
import jax.numpy as jnp
from jax.experimental import pallas as pl
from jax.experimental.pallas import tpu as pltpu


def _unet_down_kernel(z_ref, w_ref, o_ref, col_ref, *, cin, wo, p, eps, slope):
    """One grid step = one (sample, Cout-tile).

    z_ref:   (1, 8, Cin, Lw) bf16 -- flat phase/column planes, Lw = (Ho+1)*Wo,
             plane index = pa*4 + kw,  plane[ci, i*Wo + j] = xpad[ci, 2i+pa, 2j+kw].
    w_ref:   (TC, KC) bf16 -- conv weight, column order (kh, kw, cin).
    o_ref:   (1, TC, P) f32 -- NCHW-flat output block (P = Ho*Wo on the lane axis).
    col_ref: (KC, P) bf16 VMEM scratch -- im2col tile assembled on-chip.
    """
    # Assemble the (KC, P) im2col tile: for output position p = ho*Wo + wo and tap (kh, kw)
    # with kh = 2a + pa, the source element is plane[pa*4 + kw][ci, a*Wo + p] -- a contiguous
    # window at a static lane offset of 0 or Wo (cheap shifted load, no relayout).
    for kh in range(4):
        a, pa = divmod(kh, 2)
        for kw in range(4):
            kk = kh * 4 + kw
            col_ref[kk * cin:(kk + 1) * cin, :] = z_ref[0, pa * 4 + kw, :, pl.ds(a * wo, p)]

    # Conv as a single MXU matmul with f32 accumulation: (TC, KC) @ (KC, P) -> (TC, P).
    y = jnp.dot(w_ref[...], col_ref[...], preferred_element_type=jnp.float32)

    # InstanceNorm2d (biased variance, eps=1e-5 default) + LeakyReLU(0.2), one fused pass.
    inv_p = 1.0 / p
    mean = jnp.sum(y, axis=-1, keepdims=True) * inv_p
    var = jnp.maximum(jnp.sum(y * y, axis=-1, keepdims=True) * inv_p - mean * mean, 0.0)
    yn = (y - mean) * jax.lax.rsqrt(var + eps)
    o_ref[0] = jnp.maximum(yn, slope * yn)


def _vmem_capacity_bytes():
    try:
        cap = getattr(pltpu.get_tpu_info(), "vmem_capacity_bytes", None)
        if cap:
            return int(cap)
    except Exception:
        pass
    return 64 * 1024 * 1024  # conservative fallback (v7x per-TensorCore VMEM)


def _pick_cout_tile(n_batch, cout, cin, p, lw, budget):
    """Largest Cout tile (divisor of Cout, multiple of 8 when split) whose footprint fits."""
    kc = 16 * cin

    def need(tc):
        return (2 * 8 * cin * lw * 2      # phase-plane block, bf16, double-buffered
                + 2 * tc * kc * 2         # weight block, bf16, double-buffered
                + 2 * tc * p * 4          # output block, f32, double-buffered
                + kc * p * 2              # im2col VMEM scratch
                + (2 << 20))              # pipelining / layout-padding margin

    cands = [cout] + [d for d in range(cout - 8, 7, -8) if cout % d == 0]
    tc = cands[-1]
    for c in cands:                        # descending -> first fit is the largest
        if need(c) <= budget:
            tc = c
            break
    # Megacore nudge (v7x): with a single sample, split Cout so both TensorCores get work.
    if n_batch == 1 and tc == cout and cout >= 16 and cout % 16 == 0:
        tc = cout // 2
    return tc, need(tc)


def unet_down(x, weight, *, eps=1e-5, negative_slope=0.2):
    """x: (N, Cin, H, W) f32, weight: (Cout, Cin, 4, 4) f32 -> (N, Cout, H//2, W//2) f32."""
    # TODO(synk): nn.Dropout branch is only constructed when dropout > 0 (default 0.0); not implemented.
    # TODO(synk): very deep layers with P = Ho*Wo < 128 under-fill the lane axis (masked stores);
    #             packing several samples per lane tile is left as a follow-up.
    N, Cin, H, W = x.shape
    Cout = weight.shape[0]
    K, S, Pd = 4, 2, 1
    Ho = (H + 2 * Pd - K) // S + 1
    Wo = (W + 2 * Pd - K) // S + 1
    P, KC, Lw = Ho * Wo, Cin * K * K, (Ho + 1) * Wo

    # Phase-split / column-deinterleaved staging array (bf16) replacing the old 4x HBM im2col:
    #   z[n, pa*4+kw, ci, i*Wo + j] = xpad[n, ci, 2i + pa, 2j + kw]
    xp = jnp.pad(x.astype(jnp.bfloat16), ((0, 0), (0, 0), (Pd, Pd), (Pd, Pd)))
    planes = []
    for pa in range(2):
        for kw in range(K):
            planes.append(xp[:, :, pa:pa + 2 * (Ho + 1):2, kw:kw + 2 * Wo:2])  # (N, Cin, Ho+1, Wo)
    z = jnp.stack(planes, axis=1).reshape(N, 2 * K, Cin, Lw)

    # Weight flattened with column order (kh, kw, cin) to match the im2col row order.
    w_flat = weight.transpose(0, 2, 3, 1).reshape(Cout, KC).astype(jnp.bfloat16)

    budget = int(_vmem_capacity_bytes() * 0.85)
    TC, needed = _pick_cout_tile(N, Cout, Cin, P, Lw, budget)
    num_ct = Cout // TC
    vmem_limit = min(budget, max(needed, 32 * 1024 * 1024))

    out = pl.pallas_call(
        functools.partial(_unet_down_kernel, cin=Cin, wo=Wo, p=P,
                          eps=eps, slope=negative_slope),
        out_shape=jax.ShapeDtypeStruct((N, Cout, P), jnp.float32),
        grid=(N, num_ct),
        in_specs=[
            # Planes: block index constant across the inner Cout axis -> fetched once per sample.
            pl.BlockSpec((1, 2 * K, Cin, Lw), lambda n, c: (n, 0, 0, 0)),
            pl.BlockSpec((TC, KC), lambda n, c: (c, 0)),
        ],
        out_specs=pl.BlockSpec((1, TC, P), lambda n, c: (n, c, 0)),
        scratch_shapes=[pltpu.VMEM((KC, P), jnp.bfloat16)],
        compiler_params=pltpu.CompilerParams(
            dimension_semantics=("parallel", "parallel"),
            vmem_limit_bytes=vmem_limit,
        ),
    )(z, w_flat)

    return out.reshape(N, Cout, Ho, Wo)  # already NCHW-flat; reshape is free


def _reference(x, weight, eps=1e-5, slope=0.2):
    # Pure-JAX reference mirroring the PyTorch module (same bf16-input / f32-accumulate policy).
    y = jax.lax.conv_general_dilated(
        x.astype(jnp.bfloat16), weight.astype(jnp.bfloat16),
        window_strides=(2, 2), padding=[(1, 1), (1, 1)],
        dimension_numbers=("NCHW", "OIHW", "NCHW"),
        preferred_element_type=jnp.float32)
    mean = jnp.mean(y, axis=(2, 3), keepdims=True)
    var = jnp.mean((y - mean) ** 2, axis=(2, 3), keepdims=True)
    y = (y - mean) * jax.lax.rsqrt(var + eps)
    return jnp.where(y >= 0, y, slope * y)


if __name__ == "__main__":
    key = jax.random.PRNGKey(0)
    kx, kw = jax.random.split(key)

    N, Cin, H, W = 2, 4, 16, 16
    Cout = 8
    x = jax.random.normal(kx, (N, Cin, H, W), dtype=jnp.float32)
    # Deterministic synthetic weights (Conv2d(in=4, out=8, k=4), bias=False).
    weight = 0.05 * jax.random.normal(kw, (Cout, Cin, 4, 4), dtype=jnp.float32)

    out = jax.block_until_ready(unet_down(x, weight))
    ref = jax.block_until_ready(_reference(x, weight))

    assert out.shape == (N, Cout, H // 2, W // 2), out.shape
    assert jnp.allclose(out, ref, atol=5e-3, rtol=5e-3), float(jnp.max(jnp.abs(out - ref)))
    print("KERNEL_OK")
</pallas_src>

<mosaic_0001>
module attributes {stable_mosaic.version = 11 : i64} {
  func.func @_unet_down_kernel(%arg0: i32, %arg1: i32, %arg2: memref<1x8x4x72xbf16, #tpu.memory_space<vmem>>, %arg3: memref<8x64xbf16, #tpu.memory_space<vmem>>, %arg4: memref<1x8x64xf32, #tpu.memory_space<vmem>>, %arg5: memref<64x64xbf16, #tpu.memory_space<vmem>>) attributes {dimension_semantics = [#tpu.dimension_semantics<parallel>, #tpu.dimension_semantics<parallel>], iteration_bounds = array<i64: 2, 1>, scalar_prefetch = 0 : i64, scratch_operands = 1 : i64, tpu.core_type = #tpu.core_type<tc>, window_params = [{transform_indices = @transform_0, window_bounds = array<i64: 1, 8, 4, 72>}, {transform_indices = @transform_1, window_bounds = array<i64: 8, 64>}, {transform_indices = @transform_2, window_bounds = array<i64: 1, 8, 64>}]} {
    %c0 = arith.constant 0 : index
    %c0_0 = arith.constant 0 : index
    %c0_1 = arith.constant 0 : index
    %c0_2 = arith.constant 0 : index
    %0 = vector.load %arg2[%c0, %c0_0, %c0_1, %c0_2] : memref<1x8x4x72xbf16, #tpu.memory_space<vmem>>, vector<1x1x4x64xbf16>
    %1 = vector.shape_cast %0 : vector<1x1x4x64xbf16> to vector<4x64xbf16>
    %c0_3 = arith.constant 0 : index
    %c0_4 = arith.constant 0 : index
    %2 = vector.load %arg5[%c0_3, %c0_4] : memref<64x64xbf16, #tpu.memory_space<vmem>>, vector<4x64xbf16>
    tpu.vector_store %arg5[%c0_3, %c0_4], %1 {strides = array<i32>} : memref<64x64xbf16, #tpu.memory_space<vmem>>, vector<4x64xbf16>,
    %c0_5 = arith.constant 0 : index
    %c1 = arith.constant 1 : index
    %c0_6 = arith.constant 0 : index
    %c0_7 = arith.constant 0 : index
    %3 = vector.load %arg2[%c0_5, %c1, %c0_6, %c0_7] : memref<1x8x4x72xbf16, #tpu.memory_space<vmem>>, vector<1x1x4x64xbf16>
    %4 = vector.shape_cast %3 : vector<1x1x4x64xbf16> to vector<4x64xbf16>
    %c4 = arith.constant 4 : index
    %c0_8 = arith.constant 0 : index
    %5 = vector.load %arg5[%c4, %c0_8] : memref<64x64xbf16, #tpu.memory_space<vmem>>, vector<4x64xbf16>
    tpu.vector_store %arg5[%c4, %c0_8], %4 {strides = array<i32>} : memref<64x64xbf16, #tpu.memory_space<vmem>>, vector<4x64xbf16>,
    %c0_9 = arith.constant 0 : index
    %c2 = arith.constant 2 : index
    %c0_10 = arith.constant 0 : index
    %c0_11 = arith.constant 0 : index
    %6 = vector.load %arg2[%c0_9, %c2, %c0_10, %c0_11] : memref<1x8x4x72xbf16, #tpu.memory_space<vmem>>, vector<1x1x4x64xbf16>
    %7 = vector.shape_cast %6 : vector<1x1x4x64xbf16> to vector<4x64xbf16>
    %c8 = arith.constant 8 : index
    %c0_12 = arith.constant 0 : index
    %8 = vector.load %arg5[%c8, %c0_12] : memref<64x64xbf16, #tpu.memory_space<vmem>>, vector<4x64xbf16>
    tpu.vector_store %arg5[%c8, %c0_12], %7 {strides = array<i32>} : memref<64x64xbf16, #tpu.memory_space<vmem>>, vector<4x64xbf16>,
    %c0_13 = arith.constant 0 : index
    %c3 = arith.constant 3 : index
    %c0_14 = arith.constant 0 : index
    %c0_15 = arith.constant 0 : index
    %9 = vector.load %arg2[%c0_13, %c3, %c0_14, %c0_15] : memref<1x8x4x72xbf16, #tpu.memory_space<vmem>>, vector<1x1x4x64xbf16>
    %10 = vector.shape_cast %9 : vector<1x1x4x64xbf16> to vector<4x64xbf16>
    %c12 = arith.constant 12 : index
    %c0_16 = arith.constant 0 : index
    %11 = vector.load %arg5[%c12, %c0_16] : memref<64x64xbf16, #tpu.memory_space<vmem>>, vector<4x64xbf16>
    tpu.vector_store %arg5[%c12, %c0_16], %10 {strides = array<i32>} : memref<64x64xbf16, #tpu.memory_space<vmem>>, vector<4x64xbf16>,
    %c0_17 = arith.constant 0 : index
    %c4_18 = arith.constant 4 : index
    %c0_19 = arith.constant 0 : index
    %c0_20 = arith.constant 0 : index
    %12 = vector.load %arg2[%c0_17, %c4_18, %c0_19, %c0_20] : memref<1x8x4x72xbf16, #tpu.memory_space<vmem>>, vector<1x1x4x64xbf16>
    %13 = vector.shape_cast %12 : vector<1x1x4x64xbf16> to vector<4x64xbf16>
    %c16 = arith.constant 16 : index
    %c0_21 = arith.constant 0 : index
    %14 = vector.load %arg5[%c16, %c0_21] : memref<64x64xbf16, #tpu.memory_space<vmem>>, vector<4x64xbf16>
    tpu.vector_store %arg5[%c16, %c0_21], %13 {strides = array<i32>} : memref<64x64xbf16, #tpu.memory_space<vmem>>, vector<4x64xbf16>,
    %c0_22 = arith.constant 0 : index
    %c5 = arith.constant 5 : index
    %c0_23 = arith.constant 0 : index
    %c0_24 = arith.constant 0 : index
    %15 = vector.load %arg2[%c0_22, %c5, %c0_23, %c0_24] : memref<1x8x4x72xbf16, #tpu.memory_space<vmem>>, vector<1x1x4x64xbf16>
    %16 = vector.shape_cast %15 : vector<1x1x4x64xbf16> to vector<4x64xbf16>
    %c20 = arith.constant 20 : index
    %c0_25 = arith.constant 0 : index
    %17 = vector.load %arg5[%c20, %c0_25] : memref<64x64xbf16, #tpu.memory_space<vmem>>, vector<4x64xbf16>
    tpu.vector_store %arg5[%c20, %c0_25], %16 {strides = array<i32>} : memref<64x64xbf16, #tpu.memory_space<vmem>>, vector<4x64xbf16>,
    %c0_26 = arith.constant 0 : index
    %c6 = arith.constant 6 : index
    %c0_27 = arith.constant 0 : index
    %c0_28 = arith.constant 0 : index
    %18 = vector.load %arg2[%c0_26, %c6, %c0_27, %c0_28] : memref<1x8x4x72xbf16, #tpu.memory_space<vmem>>, vector<1x1x4x64xbf16>
    %19 = vector.shape_cast %18 : vector<1x1x4x64xbf16> to vector<4x64xbf16>
    %c24 = arith.constant 24 : index
    %c0_29 = arith.constant 0 : index
    %20 = vector.load %arg5[%c24, %c0_29] : memref<64x64xbf16, #tpu.memory_space<vmem>>, vector<4x64xbf16>
    tpu.vector_store %arg5[%c24, %c0_29], %19 {strides = array<i32>} : memref<64x64xbf16, #tpu.memory_space<vmem>>, vector<4x64xbf16>,
    %c0_30 = arith.constant 0 : index
    %c7 = arith.constant 7 : index
    %c0_31 = arith.constant 0 : index
    %c0_32 = arith.constant 0 : index
    %21 = vector.load %arg2[%c0_30, %c7, %c0_31, %c0_32] : memref<1x8x4x72xbf16, #tpu.memory_space<vmem>>, vector<1x1x4x64xbf16>
    %22 = vector.shape_cast %21 : vector<1x1x4x64xbf16> to vector<4x64xbf16>
    %c28 = arith.constant 28 : index
    %c0_33 = arith.constant 0 : index
    %23 = vector.load %arg5[%c28, %c0_33] : memref<64x64xbf16, #tpu.memory_space<vmem>>, vector<4x64xbf16>
    tpu.vector_store %arg5[%c28, %c0_33], %22 {strides = array<i32>} : memref<64x64xbf16, #tpu.memory_space<vmem>>, vector<4x64xbf16>,
    %c0_34 = arith.constant 0 : index
    %c0_35 = arith.constant 0 : index
    %c0_36 = arith.constant 0 : index
    %c8_37 = arith.constant 8 : index
    %24 = vector.load %arg2[%c0_34, %c0_35, %c0_36, %c8_37] : memref<1x8x4x72xbf16, #tpu.memory_space<vmem>>, vector<1x1x4x64xbf16>
    %25 = vector.shape_cast %24 : vector<1x1x4x64xbf16> to vector<4x64xbf16>
    %c32 = arith.constant 32 : index
    %c0_38 = arith.constant 0 : index
    %26 = vector.load %arg5[%c32, %c0_38] : memref<64x64xbf16, #tpu.memory_space<vmem>>, vector<4x64xbf16>
    tpu.vector_store %arg5[%c32, %c0_38], %25 {strides = array<i32>} : memref<64x64xbf16, #tpu.memory_space<vmem>>, vector<4x64xbf16>,
    %c0_39 = arith.constant 0 : index
    %c1_40 = arith.constant 1 : index
    %c0_41 = arith.constant 0 : index
    %c8_42 = arith.constant 8 : index
    %27 = vector.load %arg2[%c0_39, %c1_40, %c0_41, %c8_42] : memref<1x8x4x72xbf16, #tpu.memory_space<vmem>>, vector<1x1x4x64xbf16>
    %28 = vector.shape_cast %27 : vector<1x1x4x64xbf16> to vector<4x64xbf16>
    %c36 = arith.constant 36 : index
    %c0_43 = arith.constant 0 : index
    %29 = vector.load %arg5[%c36, %c0_43] : memref<64x64xbf16, #tpu.memory_space<vmem>>, vector<4x64xbf16>
    tpu.vector_store %arg5[%c36, %c0_43], %28 {strides = array<i32>} : memref<64x64xbf16, #tpu.memory_space<vmem>>, vector<4x64xbf16>,
    %c0_44 = arith.constant 0 : index
    %c2_45 = arith.constant 2 : index
    %c0_46 = arith.constant 0 : index
    %c8_47 = arith.constant 8 : index
    %30 = vector.load %arg2[%c0_44, %c2_45, %c0_46, %c8_47] : memref<1x8x4x72xbf16, #tpu.memory_space<vmem>>, vector<1x1x4x64xbf16>
    %31 = vector.shape_cast %30 : vector<1x1x4x64xbf16> to vector<4x64xbf16>
    %c40 = arith.constant 40 : index
    %c0_48 = arith.constant 0 : index
    %32 = vector.load %arg5[%c40, %c0_48] : memref<64x64xbf16, #tpu.memory_space<vmem>>, vector<4x64xbf16>
    tpu.vector_store %arg5[%c40, %c0_48], %31 {strides = array<i32>} : memref<64x64xbf16, #tpu.memory_space<vmem>>, vector<4x64xbf16>,
    %c0_49 = arith.constant 0 : index
    %c3_50 = arith.constant 3 : index
    %c0_51 = arith.constant 0 : index
    %c8_52 = arith.constant 8 : index
    %33 = vector.load %arg2[%c0_49, %c3_50, %c0_51, %c8_52] : memref<1x8x4x72xbf16, #tpu.memory_space<vmem>>, vector<1x1x4x64xbf16>
    %34 = vector.shape_cast %33 : vector<1x1x4x64xbf16> to vector<4x64xbf16>
    %c44 = arith.constant 44 : index
    %c0_53 = arith.constant 0 : index
    %35 = vector.load %arg5[%c44, %c0_53] : memref<64x64xbf16, #tpu.memory_space<vmem>>, vector<4x64xbf16>
    tpu.vector_store %arg5[%c44, %c0_53], %34 {strides = array<i32>} : memref<64x64xbf16, #tpu.memory_space<vmem>>, vector<4x64xbf16>,
    %c0_54 = arith.constant 0 : index
    %c4_55 = arith.constant 4 : index
    %c0_56 = arith.constant 0 : index
    %c8_57 = arith.constant 8 : index
    %36 = vector.load %arg2[%c0_54, %c4_55, %c0_56, %c8_57] : memref<1x8x4x72xbf16, #tpu.memory_space<vmem>>, vector<1x1x4x64xbf16>
    %37 = vector.shape_cast %36 : vector<1x1x4x64xbf16> to vector<4x64xbf16>
    %c48 = arith.constant 48 : index
    %c0_58 = arith.constant 0 : index
    %38 = vector.load %arg5[%c48, %c0_58] : memref<64x64xbf16, #tpu.memory_space<vmem>>, vector<4x64xbf16>
    tpu.vector_store %arg5[%c48, %c0_58], %37 {strides = array<i32>} : memref<64x64xbf16, #tpu.memory_space<vmem>>, vector<4x64xbf16>,
    %c0_59 = arith.constant 0 : index
    %c5_60 = arith.constant 5 : index
    %c0_61 = arith.constant 0 : index
    %c8_62 = arith.constant 8 : index
    %39 = vector.load %arg2[%c0_59, %c5_60, %c0_61, %c8_62] : memref<1x8x4x72xbf16, #tpu.memory_space<vmem>>, vector<1x1x4x64xbf16>
    %40 = vector.shape_cast %39 : vector<1x1x4x64xbf16> to vector<4x64xbf16>
    %c52 = arith.constant 52 : index
    %c0_63 = arith.constant 0 : index
    %41 = vector.load %arg5[%c52, %c0_63] : memref<64x64xbf16, #tpu.memory_space<vmem>>, vector<4x64xbf16>
    tpu.vector_store %arg5[%c52, %c0_63], %40 {strides = array<i32>} : memref<64x64xbf16, #tpu.memory_space<vmem>>, vector<4x64xbf16>,
    %c0_64 = arith.constant 0 : index
    %c6_65 = arith.constant 6 : index
    %c0_66 = arith.constant 0 : index
    %c8_67 = arith.constant 8 : index
    %42 = vector.load %arg2[%c0_64, %c6_65, %c0_66, %c8_67] : memref<1x8x4x72xbf16, #tpu.memory_space<vmem>>, vector<1x1x4x64xbf16>
    %43 = vector.shape_cast %42 : vector<1x1x4x64xbf16> to vector<4x64xbf16>
    %c56 = arith.constant 56 : index
    %c0_68 = arith.constant 0 : index
    %44 = vector.load %arg5[%c56, %c0_68] : memref<64x64xbf16, #tpu.memory_space<vmem>>, vector<4x64xbf16>
    tpu.vector_store %arg5[%c56, %c0_68], %43 {strides = array<i32>} : memref<64x64xbf16, #tpu.memory_space<vmem>>, vector<4x64xbf16>,
    %c0_69 = arith.constant 0 : index
    %c7_70 = arith.constant 7 : index
    %c0_71 = arith.constant 0 : index
    %c8_72 = arith.constant 8 : index
    %45 = vector.load %arg2[%c0_69, %c7_70, %c0_71, %c8_72] : memref<1x8x4x72xbf16, #tpu.memory_space<vmem>>, vector<1x1x4x64xbf16>
    %46 = vector.shape_cast %45 : vector<1x1x4x64xbf16> to vector<4x64xbf16>
    %c60 = arith.constant 60 : index
    %c0_73 = arith.constant 0 : index
    %47 = vector.load %arg5[%c60, %c0_73] : memref<64x64xbf16, #tpu.memory_space<vmem>>, vector<4x64xbf16>
    tpu.vector_store %arg5[%c60, %c0_73], %46 {strides = array<i32>} : memref<64x64xbf16, #tpu.memory_space<vmem>>, vector<4x64xbf16>,
    %c0_74 = arith.constant 0 : index
    %c0_75 = arith.constant 0 : index
    %48 = vector.load %arg3[%c0_74, %c0_75] : memref<8x64xbf16, #tpu.memory_space<vmem>>, vector<8x64xbf16>
    %c0_76 = arith.constant 0 : index
    %c0_77 = arith.constant 0 : index
    %49 = vector.load %arg5[%c0_76, %c0_77] : memref<64x64xbf16, #tpu.memory_space<vmem>>, vector<64x64xbf16>
    %cst = arith.constant dense<0.000000e+00> : vector<8x64xf32>
    %50 = tpu.matmul %48, %49, %cst {dimension_numbers = #tpu.dot_dimension_numbers<[1], [0], [0], [1], [0, 0, 1, 1], [], []>} : vector<8x64xbf16>, vector<64x64xbf16>, vector<8x64xf32> -> vector<8x64xf32>
    %cst_78 = arith.constant dense<0.000000e+00> : vector<8xf32>
    %51 = vector.multi_reduction <add>, %50, %cst_78 [1] : vector<8x64xf32> to vector<8xf32>
    %52 = vector.shape_cast %51 : vector<8xf32> to vector<8x1xf32>
    %cst_79 = arith.constant 1.562500e-02 : f32
    %53 = vector.broadcast %cst_79 : f32 to vector<8x1xf32>
    %54 = arith.mulf %52, %53 : vector<8x1xf32>
    %55 = arith.mulf %50, %50 : vector<8x64xf32>
    %cst_80 = arith.constant dense<0.000000e+00> : vector<8xf32>
    %56 = vector.multi_reduction <add>, %55, %cst_80 [1] : vector<8x64xf32> to vector<8xf32>
    %57 = vector.shape_cast %56 : vector<8xf32> to vector<8x1xf32>
    %cst_81 = arith.constant 1.562500e-02 : f32
    %58 = vector.broadcast %cst_81 : f32 to vector<8x1xf32>
    %59 = arith.mulf %57, %58 : vector<8x1xf32>
    %60 = arith.mulf %54, %54 : vector<8x1xf32>
    %61 = arith.subf %59, %60 : vector<8x1xf32>
    %cst_82 = arith.constant 0.000000e+00 : f32
    %62 = vector.broadcast %cst_82 : f32 to vector<8x1xf32>
    %63 = arith.maximumf %61, %62 : vector<8x1xf32>
    %64 = vector.broadcast %54 : vector<8x1xf32> to vector<8x64xf32>
    %65 = arith.subf %50, %64 : vector<8x64xf32>
    %cst_83 = arith.constant 9.99999974E-6 : f32
    %66 = vector.broadcast %cst_83 : f32 to vector<8x1xf32>
    %67 = arith.addf %63, %66 : vector<8x1xf32>
    %68 = math.rsqrt %67 : vector<8x1xf32>
    %69 = vector.broadcast %68 : vector<8x1xf32> to vector<8x64xf32>
    %70 = arith.mulf %65, %69 : vector<8x64xf32>
    %cst_84 = arith.constant 2.000000e-01 : f32
    %71 = vector.broadcast %cst_84 : f32 to vector<8x64xf32>
    %72 = arith.mulf %71, %70 : vector<8x64xf32>
    %73 = arith.maximumf %70, %72 : vector<8x64xf32>
    %c0_85 = arith.constant 0 : index
    %c0_86 = arith.constant 0 : index
    %c0_87 = arith.constant 0 : index
    %74 = vector.load %arg4[%c0_85, %c0_86, %c0_87] : memref<1x8x64xf32, #tpu.memory_space<vmem>>, vector<1x8x64xf32>
    %75 = vector.shape_cast %74 : vector<1x8x64xf32> to vector<8x64xf32>
    %76 = vector.shape_cast %73 : vector<8x64xf32> to vector<1x8x64xf32>
    tpu.vector_store %arg4[%c0_85, %c0_86, %c0_87], %76 {strides = array<i32>} : memref<1x8x64xf32, #tpu.memory_space<vmem>>, vector<1x8x64xf32>,
    return
  }
  func.func @transform_0(%arg0: i32, %arg1: i32) -> (i32, i32, i32, i32) {
    %c0_i32 = arith.constant 0 : i32
    %c0_i32_0 = arith.constant 0 : i32
    %c0_i32_1 = arith.constant 0 : i32
    %c0_i32_2 = arith.constant 0 : i32
    return %arg0, %c0_i32, %c0_i32_0, %c0_i32_1 : i32, i32, i32, i32
  }
  func.func @transform_1(%arg0: i32, %arg1: i32) -> (i32, i32) {
    %c0_i32 = arith.constant 0 : i32
    %c0_i32_0 = arith.constant 0 : i32
    return %arg1, %c0_i32 : i32, i32
  }
  func.func @transform_2(%arg0: i32, %arg1: i32) -> (i32, i32, i32) {
    %c0_i32 = arith.constant 0 : i32
    %c0_i32_0 = arith.constant 0 : i32
    return %arg0, %arg1, %c0_i32 : i32, i32, i32
  }
}

</mosaic_0001>

<llo_original>
// kernel: tpu_custom_call.1
$region0: #{tpu_custom_call.1}
  #allocation0 [shape = 'u32[]', space=smem, size = 0x4, offset = 0x4, fixed_abs, tag = 'smem constant byte address 0x4 - core index']
  #allocation1 [shape = 'u32[144,128]{1,0:T(1,128)}', space=vmem, size = 0x12000, scoped, tag = 'internal scratch']
  #allocation2 [shape = 'bf16[64,64]{1,0:T(16,128)(2,1)}', space=vmem, size = 0x4000, scoped, tag = 'scratch operand']
  %s0 = inlined_call_operand.hbm [shape: bf16[2,8,4,72], index: 0, kind: input, shape index: {}]
  %s1 = inlined_call_operand.hbm [shape: bf16[8,64], index: 1, kind: input, shape index: {}]
  %s2 = inlined_call_operand.hbm [shape: f32[2,8,64], index: 2, kind: output, shape index: {}]
  %s3 = sld [smem:[#allocation0]]
  $region49: #{tpu_custom_call.1} parent=0
    _
  %s5 = ssub.s32 1, %s3
  %s6 = scalar_select 0, %s5, %s3
  $region1: #{tpu_custom_call.1} parent=0
    #allocation3 [shape = 'u8[16384]{0}', space=vmem, size = 0x4000, scoped, tag = 'input window, operand 0']
    #allocation4 [shape = 's32[2]{0}', space=sflag, size = 0x8, scoped, tag = 'scoped memory for tpu_custom_call.1']
    #allocation5 [shape = 's32[2]{0}', space=sflag, size = 0x8, scoped, tag = 'scoped memory for tpu_custom_call.1']
    #allocation6 [shape = 'u8[2048]{0}', space=vmem, size = 0x800, scoped, tag = 'input window, operand 1, single buffered']
    #allocation7 [shape = 's32[1]{0}', space=sflag, size = 0x4, scoped, tag = 'scoped memory for tpu_custom_call.1']
    #allocation8 [shape = 'u8[8192]{0}', space=vmem, size = 0x2000, scoped, tag = 'output window, operand 0']
    %7 = vsyncpa [#allocation4], 0
    %s8 = scalar_lea.sflag [#allocation4], 1
    %9 = vsyncpa %s8, 0
    %10 = vsyncpa [#allocation7], 0
    %11 = vsyncpa [#allocation5], 0
    %s12 = scalar_lea.sflag [#allocation5], 1
    %13 = vsyncpa %s12, 0
    loop: start=0, step=1, limit=4
    $region2: #{tpu_custom_call.1} parent=1 // loop_pre_header
      _
    $region3: #{tpu_custom_call.1} parent=1 // loop_header
      %s15 = sphi 0, %s19
      %p16 = scmp.ge.s32.totalorder %s15, 4
      %s22 = sphi 0, %s34
      %s23 = sphi 0, %s30
      %s24 = sphi 0, %s22
      %s25 = sphi 0, %s23
      %s26 = sphi 0, %s24
      %s27 = sphi 0, %s25
      %s37 = sphi 0, %s39
      %s40 = sphi 0, %s37
      %s41 = sphi 0, %s40
      %s57 = sphi 0, %s41
      %s63 = sphi 0, %s65
      %s66 = sphi 0, %s63
      %s67 = sphi 0, %s66
      %s83 = sphi 0, %s67
      %s91 = sphi 0, %s93
      %s94 = sphi 0, %s91
      %s95 = sphi 0, %s94
      %s111 = sphi 0, %s95
    $region4: #{tpu_custom_call.1} parent=1 // loop_header_branch
      %18 = sbr.rel (%p16) target = $region8
    $region5: #{tpu_custom_call.1} parent=1 // loop_body
      %s20 = ssub.s32 %s15, 1
      %s21 = ssub.s32 %s15, 2
      %s28 = sadd.s32 1, %s23
      %p29 = scmp.ge.s32.totalorder %s28, 1
      %s30 = scalar_select %p29, 0, %s28
      %s31 = sadd.s32 1, %s22
      %s32 = scalar_select %p29, %s31, %s22
      %p33 = scmp.ge.s32.totalorder %s32, 2
      %s34 = scalar_select %p33, 0, %s32
      %s35 = ssub.s32 %s22, %s34
      %p36 = scmp.eq.s32.totalorder %s35, 0
      %s38 = sadd.s32 %s37, 1
      %s39 = scalar_select %p36, %s37, %s38
      %p42 = pneg %p36
      %p43 = scmp.eq.s32.totalorder %s15, 1
      %p44 = por %p42, %p43
      %p45 = scmp.ne.s32.totalorder %s37, %s40
      %p46 = scmp.eq.s32.totalorder %s15, 0
      %p47 = por %p45, %p46
      %p48 = scmp.ne.s32.totalorder %s37, %s40
      %p49 = scmp.eq.s32.totalorder %s20, 1
      %p50 = por %p48, %p49
      %p51 = scmp.ne.s32.totalorder %s40, %s41
      %p52 = scmp.eq.s32.totalorder %s20, 0
      %p53 = por %p51, %p52
      %p54 = scmp.ne.s32.totalorder %s40, %s41
      %p55 = scmp.eq.s32.totalorder %s21, 1
      %p56 = por %p54, %p55
      %p58 = scmp.ne.s32.totalorder %s41, %s57
      %p59 = scmp.eq.s32.totalorder %s21, 0
      %p60 = por %p58, %p59
      %s61 = ssub.s32 %s23, %s30
      %p62 = scmp.eq.s32.totalorder %s61, 0
      %s64 = sadd.s32 %s63, 1
      %s65 = scalar_select %p62, %s63, %s64
      %p68 = pneg %p62
      %p69 = scmp.eq.s32.totalorder %s15, 1
      %p70 = por %p68, %p69
      %p71 = scmp.ne.s32.totalorder %s63, %s66
      %p72 = scmp.eq.s32.totalorder %s15, 0
      %p73 = por %p71, %p72
      %p74 = scmp.ne.s32.totalorder %s63, %s66
      %p75 = scmp.eq.s32.totalorder %s20, 1
      %p76 = por %p74, %p75
      %p77 = scmp.ne.s32.totalorder %s66, %s67
      %p78 = scmp.eq.s32.totalorder %s20, 0
      %p79 = por %p77, %p78
      %p80 = scmp.ne.s32.totalorder %s66, %s67
      %p81 = scmp.eq.s32.totalorder %s21, 1
      %p82 = por %p80, %p81
      %p84 = scmp.ne.s32.totalorder %s67, %s83
      %p85 = scmp.eq.s32.totalorder %s21, 0
      %p86 = por %p84, %p85
      %s87 = ssub.s32 %s22, %s34
      %s88 = ssub.s32 %s23, %s30
      %s89 = sor.u32 %s87, %s88
      %p90 = scmp.eq.s32.totalorder %s89, 0
      %s92 = sadd.s32 %s91, 1
      %s93 = scalar_select %p90, %s91, %s92
      %p96 = pneg %p90
      %p97 = scmp.eq.s32.totalorder %s15, 1
      %p98 = por %p96, %p97
      %p99 = scmp.ne.s32.totalorder %s91, %s94
      %p100 = scmp.eq.s32.totalorder %s15, 0
      %p101 = por %p99, %p100
      %p102 = scmp.ne.s32.totalorder %s91, %s94
      %p103 = scmp.eq.s32.totalorder %s20, 1
      %p104 = por %p102, %p103
      %p105 = scmp.ne.s32.totalorder %s94, %s95
      %p106 = scmp.eq.s32.totalorder %s20, 0
      %p107 = por %p105, %p106
      %p108 = scmp.ne.s32.totalorder %s94, %s95
      %p109 = scmp.eq.s32.totalorder %s21, 1
      %p110 = por %p108, %p109
      %p112 = scmp.ne.s32.totalorder %s95, %s111
      %p113 = scmp.eq.s32.totalorder %s21, 0
      %p114 = por %p112, %p113
      %p115 = scmp.le.s32.totalorder 1, %s15
      %p116 = scmp.lt.s32.totalorder %s15, 3
      %p117 = pnand %p115, %p116
      %p118 = pneg %p117
      // Predicated region
      $region9: #{tpu_custom_call.1} parent=5 // pred_check
        _
      $region10: #{tpu_custom_call.1} parent=5 // pred_check_branch
        %120 = sbr.rel (%p117) target = $region12
      $region11: #{tpu_custom_call.1} parent=5 // pred_region
        %s121 = ssub.s32 %s15, 1
        // Predicated region
        $region13: #{tpu_custom_call.1} parent=11 // pred_check
          %p122 = pneg %p79
        $region14: #{tpu_custom_call.1} parent=11 // pred_check_branch
          %124 = sbr.rel (%p122) target = $region16
        $region15: #{tpu_custom_call.1} parent=11 // pred_region
          %s126 = ssub.s32 64, 64
          %127 = vsyncadd [#allocation7], %s126
          %s128 = smul.addr %s25, 64
          %s129 = scalar_lea.hbm %s1, %s128
          %s131 = sshll.u32 [#allocation6], 4
          %s132 = int_to_ptr.vmem [resolvable:$true] %s131
          %134 = dma.hbm_to_vmem [thread:$0]  %s129, 64, %s132, [#allocation7]
        $region16: #{tpu_custom_call.1} parent=11 // pred_fallthru
          _
      $region12: #{tpu_custom_call.1} parent=5 // pred_fallthru
        _
      %p135 = scmp.lt.s32.totalorder %s15, 2
      // Predicated region
      $region17: #{tpu_custom_call.1} parent=5 // pred_check
        %p136 = pneg %p135
      $region18: #{tpu_custom_call.1} parent=5 // pred_check_branch
        %138 = sbr.rel (%p136) target = $region20
      $region19: #{tpu_custom_call.1} parent=5 // pred_region
        // Predicated region
        $region21: #{tpu_custom_call.1} parent=19 // pred_check
          %p139 = pneg %p47
        $region22: #{tpu_custom_call.1} parent=19 // pred_check_branch
          %141 = sbr.rel (%p139) target = $region24
        $region23: #{tpu_custom_call.1} parent=19 // pred_region
          %s142 = sand.u32 %s37, 1
          %s143 = scalar_lea.sflag [#allocation4], %s142
          %s144 = sand.u32 %s37, 1
          %s145 = smul.addr %s144, 16
          %s146 = scalar_lea.vmem [#allocation3], %s145
          %s148 = ssub.s32 256, 256
          %149 = vsyncadd %s143, %s148
          %s150 = smul.addr %s22, 8
          %s151 = smul.addr %s150, 32
          %s152 = scalar_lea.hbm %s0, %s151
          %s153 = sshll.u32 %s146, 4
          %s154 = int_to_ptr.vmem [resolvable:$true] %s153
          %159 = dma.hbm_to_vmem [thread:$0]  %s152, 256, %s154, %s143, 32, 32, 2
        $region24: #{tpu_custom_call.1} parent=19 // pred_fallthru
          _
      $region20: #{tpu_custom_call.1} parent=5 // pred_fallthru
        _
      %p160 = scmp.le.s32.totalorder 1, %s15
      %p161 = scmp.lt.s32.totalorder %s15, 3
      %p162 = pnand %p160, %p161
      %p163 = pneg %p162
      // Predicated region
      $region25: #{tpu_custom_call.1} parent=5 // pred_check
        _
      $region26: #{tpu_custom_call.1} parent=5 // pred_check_branch
        %165 = sbr.rel (%p162) target = $region28
      $region27: #{tpu_custom_call.1} parent=5 // pred_region
        %s166 = ssub.s32 %s15, 1
        %s167 = sand.u32 %s40, 1
        %s168 = scalar_lea.sflag [#allocation4], %s167
        %s169 = sand.u32 %s40, 1
        %s170 = smul.addr %s169, 16
        %s171 = scalar_lea.vmem [#allocation3], %s170
        // Predicated region
        $region29: #{tpu_custom_call.1} parent=27 // pred_check
          %p172 = pneg %p53
        $region30: #{tpu_custom_call.1} parent=27 // pred_check_branch
          %174 = sbr.rel (%p172) target = $region32
        $region31: #{tpu_custom_call.1} parent=27 // pred_region
          %175 = dma.done %s168, 256
        $region32: #{tpu_custom_call.1} parent=27 // pred_fallthru
          _
        // Predicated region
        $region33: #{tpu_custom_call.1} parent=27 // pred_check
          %p176 = pneg %p79
        $region34: #{tpu_custom_call.1} parent=27 // pred_check_branch
          %178 = sbr.rel (%p176) target = $region36
        $region35: #{tpu_custom_call.1} parent=27 // pred_region
          %179 = dma.done [#allocation7], 64
        $region36: #{tpu_custom_call.1} parent=27 // pred_fallthru
          _
        %s180 = sand.u32 %s40, 1
        %s181 = scalar_lea.sflag [#allocation4], %s180
        %s182 = sand.u32 %s40, 1
        %s183 = smul.addr %s182, 16
        %s184 = scalar_lea.vmem [#allocation3], %s183
        %p185 = pneg %p53
        %p186 = pneg %p50
        %p187 = pneg %p79
        %p188 = pneg %p76
        %p189 = pneg %p107
        %p190 = pneg %p104
        %s191 = sand.u32 %s94, 1
        %s192 = scalar_lea.sflag [#allocation5], %s191
        %s193 = sand.u32 %s94, 1
        %s194 = smul.addr %s193, 8
        %s195 = scalar_lea.vmem [#allocation8], %s194
        %v197 = vld [vmem:[%s171] sm:$0x3]
        %vm198 = vcmask 517120
        %199 = vst.msk [vmem:[#allocation2] sm:$0x3] %vm198, %v197
        %s200 = scalar_lea.vmem %s171, 2 [#allocation3]
        %v201 = vld [vmem:[%s200] sm:$0x3]
        %v203 = vcombine.low %v201, %v201
        %v205 = vunpack.c.l.s4 1983009808
        %v206 = vunpack.c.0.s8 %v205
        %v207 = vlaneseq
        %v208 = vshrl.u32 %v207, 7
        %v209 = vsub.s32 %v206, %v208
        %v210 = vrot.slane %v203, %v209
        %vm212 = vcmask 519170
        %213 = vst.msk [vmem:[#allocation2] sm:$0xc] %vm212, %v210
        %s214 = scalar_lea.vmem %s171, 4 [#allocation3]
        %v215 = vld [vmem:[%s214] sm:$0x3]
        %v218 = vunpack.c.l.s4 1983009808
        %v219 = vunpack.c.0.s8 %v218
        %v220 = vlaneseq
        %v221 = vshrl.u32 %v220, 7
        %v222 = vsub.s32 %v219, %v221
        %v223 = vrot.slane %v215, %v222
        %v224 = vcombine.low %v223, %v223
        %vm226 = vcmask 521220
        %227 = vst.msk [vmem:[#allocation2] sm:$0x30] %vm226, %v224
        %s228 = scalar_lea.vmem %s171, 6 [#allocation3]
        %v229 = vld [vmem:[%s228] sm:$0x3]
        %v231 = vcombine.low %v229, %v229
        %v233 = vunpack.c.l.s4 1983009808
        %v234 = vunpack.c.0.s8 %v233
        %v235 = vlaneseq
        %v236 = vshrl.u32 %v235, 7
        %v237 = vsub.s32 %v234, %v236
        %v238 = vrot.slane %v231, %v237
        %v239 = vcombine.low %v238, %v238
        %vm241 = vcmask 523270
        %242 = vst.msk [vmem:[#allocation2] sm:$0xc0] %vm241, %v239
        %s243 = scalar_lea.vmem %s171, 8 [#allocation3]
        %v244 = vld [vmem:[%s243] sm:$0x3]
        %245 = vst.msk [vmem:[#allocation2 + $0x8] sm:$0x3] %vm198, %v244
        %s246 = scalar_lea.vmem %s171, 10 [#allocation3]
        %v247 = vld [vmem:[%s246] sm:$0x3]
        %v249 = vcombine.low %v247, %v247
        %v251 = vunpack.c.l.s4 1983009808
        %v252 = vunpack.c.0.s8 %v251
        %v253 = vlaneseq
        %v254 = vshrl.u32 %v253, 7
        %v255 = vsub.s32 %v252, %v254
        %v256 = vrot.slane %v249, %v255
        %258 = vst.msk [vmem:[#allocation2 + $0x8] sm:$0xc] %vm212, %v256
        %s259 = scalar_lea.vmem %s171, 12 [#allocation3]
        %v260 = vld [vmem:[%s259] sm:$0x3]
        %v263 = vunpack.c.l.s4 1983009808
        %v264 = vunpack.c.0.s8 %v263
        %v265 = vlaneseq
        %v266 = vshrl.u32 %v265, 7
        %v267 = vsub.s32 %v264, %v266
        %v268 = vrot.slane %v260, %v267
        %v269 = vcombine.low %v268, %v268
        %271 = vst.msk [vmem:[#allocation2 + $0x8] sm:$0x30] %vm226, %v269
        %s272 = scalar_lea.vmem %s171, 14 [#allocation3]
        %v273 = vld [vmem:[%s272] sm:$0x3]
        %v275 = vcombine.low %v273, %v273
        %v277 = vunpack.c.l.s4 1983009808
        %v278 = vunpack.c.0.s8 %v277
        %v279 = vlaneseq
        %v280 = vshrl.u32 %v279, 7
        %v281 = vsub.s32 %v278, %v280
        %v282 = vrot.slane %v275, %v281
        %v283 = vcombine.low %v282, %v282
        %285 = vst.msk [vmem:[#allocation2 + $0x8] sm:$0xc0] %vm241, %v283
        %v286 = vld [vmem:[%s171] sm:$0x3]
        %v289 = vunpack.c.l.s4 1983009808
        %v290 = vunpack.c.0.s8 %v289
        %v291 = vlaneseq
        %v292 = vshrl.u32 %v291, 7
        %v293 = vsub.s32 %v290, %v292
        %v294 = vrot.slane %v286, %v293
        %295 = vrot.lane.b32.xlu0 %v294, 120
        %v296 = vpop.permute.xlu0 %295
        %298 = vst.msk [vmem:[#allocation2 + $0x10] sm:$0x3] %vm198, %v296
        %v299 = vld [vmem:[%s200] sm:$0x3]
        %v301 = vcombine.low %v299, %v299
        %v303 = vunpack.c.l.s4 1983009808
        %v304 = vunpack.c.0.s8 %v303
        %v305 = vlaneseq
        %v306 = vshrl.u32 %v305, 7
        %v307 = vsub.s32 %v304, %v306
        %v308 = vrot.slane %v301, %v307
        %309 = vrot.lane.b32.xlu0 %v308, 120
        %v310 = vpop.permute.xlu0 %309
        %312 = vst.msk [vmem:[#allocation2 + $0x10] sm:$0xc] %vm212, %v310
        %v313 = vld [vmem:[%s214] sm:$0x3]
        %v316 = vunpack.c.l.s4 1983009808
        %v317 = vunpack.c.0.s8 %v316
        %v318 = vlaneseq
        %v319 = vshrl.u32 %v318, 7
        %v320 = vsub.s32 %v317, %v319
        %v321 = vrot.slane %v313, %v320
        %v322 = vcombine.low %v321, %v321
        %323 = vrot.lane.b32.xlu0 %v322, 120
        %v324 = vpop.permute.xlu0 %323
        %326 = vst.msk [vmem:[#allocation2 + $0x10] sm:$0x30] %vm226, %v324
        %v327 = vld [vmem:[%s228] sm:$0x3]
        %v329 = vcombine.low %v327, %v327
        %v331 = vunpack.c.l.s4 1983009808
        %v332 = vunpack.c.0.s8 %v331
        %v333 = vlaneseq
        %v334 = vshrl.u32 %v333, 7
        %v335 = vsub.s32 %v332, %v334
        %v336 = vrot.slane %v329, %v335
        %v337 = vcombine.low %v336, %v336
        %338 = vrot.lane.b32.xlu0 %v337, 120
        %v339 = vpop.permute.xlu0 %338
        %341 = vst.msk [vmem:[#allocation2 + $0x10] sm:$0xc0] %vm241, %v339
        %v342 = vld [vmem:[%s243] sm:$0x3]
        %v345 = vunpack.c.l.s4 1983009808
        %v346 = vunpack.c.0.s8 %v345
        %v347 = vlaneseq
        %v348 = vshrl.u32 %v347, 7
        %v349 = vsub.s32 %v346, %v348
        %v350 = vrot.slane %v342, %v349
        %351 = vrot.lane.b32.xlu0 %v350, 120
        %v352 = vpop.permute.xlu0 %351
        %354 = vst.msk [vmem:[#allocation2 + $0x18] sm:$0x3] %vm198, %v352
        %v355 = vld [vmem:[%s246] sm:$0x3]
        %v357 = vcombine.low %v355, %v355
        %v359 = vunpack.c.l.s4 1983009808
        %v360 = vunpack.c.0.s8 %v359
        %v361 = vlaneseq
        %v362 = vshrl.u32 %v361, 7
        %v363 = vsub.s32 %v360, %v362
        %v364 = vrot.slane %v357, %v363
        %365 = vrot.lane.b32.xlu0 %v364, 120
        %v366 = vpop.permute.xlu0 %365
        %368 = vst.msk [vmem:[#allocation2 + $0x18] sm:$0xc] %vm212, %v366
        %v369 = vld [vmem:[%s259] sm:$0x3]
        %v372 = vunpack.c.l.s4 1983009808
        %v373 = vunpack.c.0.s8 %v372
        %v374 = vlaneseq
        %v375 = vshrl.u32 %v374, 7
        %v376 = vsub.s32 %v373, %v375
        %v377 = vrot.slane %v369, %v376
        %v378 = vcombine.low %v377, %v377
        %379 = vrot.lane.b32.xlu0 %v378, 120
        %v380 = vpop.permute.xlu0 %379
        %382 = vst.msk [vmem:[#allocation2 + $0x18] sm:$0x30] %vm226, %v380
        %v383 = vld [vmem:[%s272] sm:$0x3]
        %v385 = vcombine.low %v383, %v383
        %v387 = vunpack.c.l.s4 1983009808
        %v388 = vunpack.c.0.s8 %v387
        %v389 = vlaneseq
        %v390 = vshrl.u32 %v389, 7
        %v391 = vsub.s32 %v388, %v390
        %v392 = vrot.slane %v385, %v391
        %v393 = vcombine.low %v392, %v392
        %394 = vrot.lane.b32.xlu0 %v393, 120
        %v395 = vpop.permute.xlu0 %394
        %397 = vst.msk [vmem:[#allocation2 + $0x18] sm:$0xc0] %vm241, %v395
        %v398 = vld [vmem:[#allocation6] sm:$0xf]
        %v399 = vld [vmem:[#allocation2] sm:$0xff]
        %v400 = vld [vmem:[#allocation2 + $0x8] sm:$0xff]
        %v401 = vld [vmem:[#allocation2 + $0x10] sm:$0xff]
        %v402 = vld [vmem:[#allocation2 + $0x18] sm:$0xff]
        %vm403 = vcmask 523264
        %v405 = vsel %vm403, %v398, 0
        %407 = vmatprep.subr.bf16.mxu0 0
        %408 = vmatpush1.bf16.msra.mxu0 %v399
        %409 = vmatprep.subr.bf16.mxu0 0
        %410 = vmatpush1.bf16.msra.mxu0 %v400
        %411 = vmatprep.subr.bf16.mxu0 0
        %412 = vmatpush1.bf16.msra.mxu0 %v401
        %413 = vmatprep.subr.bf16.mxu0 0
        %414 = vmatpush1.bf16.msra.mxu0 %v402
        %415 = vmatprep.subr.bf16.mxu0 0
        %416 = vmatpush1.bf16.msra.mxu0 0
        %417 = vmatprep.subr.bf16.mxu0 0
        %418 = vmatpush1.bf16.msra.mxu0 0
        %419 = vmatprep.subr.bf16.mxu0 0
        %420 = vmatpush1.bf16.msra.mxu0 0
        %421 = vmatprep.subr.bf16.mxu0 0
        %422 = vmatpush1.bf16.msra.mxu0 0
        %423 = vmatprep.subr.bf16.mxu0 0
        %424 = vmatpush1.bf16.msra.mxu0 0
        %425 = vmatprep.subr.bf16.mxu0 0
        %426 = vmatpush1.bf16.msra.mxu0 0
        %427 = vmatprep.subr.bf16.mxu0 0
        %428 = vmatpush1.bf16.msra.mxu0 0
        %429 = vmatprep.subr.bf16.mxu0 0
        %430 = vmatpush1.bf16.msra.mxu0 0
        %431 = vmatprep.subr.bf16.mxu0 0
        %432 = vmatpush1.bf16.msra.mxu0 0
        %433 = vmatprep.subr.bf16.mxu0 0
        %434 = vmatpush1.bf16.msra.mxu0 0
        %435 = vmatprep.subr.bf16.mxu0 0
        %436 = vmatpush1.bf16.msra.mxu0 0
        %437 = vmatprep.subr.bf16.mxu0 0
        %438 = vmatpush1.bf16.msra.mxu0 0
        %439 = vmatprep.mubr.bf16.mxu0 0
        %440 = vmatmul.mubr.bf16.gmra.mrb[0].mxu0 %v405
        %v441 = vpop.f32.mrb[0].mxu0
        %v442 = vadd.f32 0.0, %v441
        %v443 = vpop.f32.mrb[0].mxu0
        %v444 = vpop.f32.mrb[0].mxu0
        %v445 = vpop.f32.mrb[0].mxu0
        %446 = vdwg.mxu0
        %v447 = vsel %vm403, %v442, 0.0
        %448 = vadd.xlane.f32.xlu0 %v447
        %v449 = vpop.xlane.xlu0 %448
        %v450 = vmul.f32 %v449, 0.015625
        %v451 = vmul.f32 %v442, %v442
        %v452 = vsel %vm403, %v451, 0.0
        %453 = vadd.xlane.f32.xlu0 %v452
        %v454 = vpop.xlane.xlu0 %453
        %v455 = vmul.f32 %v454, 0.015625
        %v456 = vmul.f32 %v450, %v450
        %v457 = vsub.f32 %v455, %v456
        %v458 = vmax.f32 %v457, 0.0
        %v459 = vsub.f32 %v442, %v450
        %v460 = vadd.f32 %v458, 1e-05
        %v461 = vrsqrt.pop %v460
        %v462 = vmul.f32 %v459, %v461
        %v463 = vmul.f32 %v462, 0.2
        %v464 = vmax.f32 %v462, %v463
        %465 = vst.msk [vmem:[%s195] sm:$0xff] %vm403, %v464
        %s466 = sand.u32 %s94, 1
        %s467 = scalar_lea.sflag [#allocation5], %s466
        %s468 = sand.u32 %s94, 1
        %s469 = smul.addr %s468, 8
        %s470 = scalar_lea.vmem [#allocation8], %s469
        // Predicated region
        $region37: #{tpu_custom_call.1} parent=27 // pred_check
          %p471 = pneg %p104
        $region38: #{tpu_custom_call.1} parent=27 // pred_check_branch
          %473 = sbr.rel (%p471) target = $region40
        $region39: #{tpu_custom_call.1} parent=27 // pred_region
          %s475 = ssub.s32 128, 128
          %476 = vsyncadd %s467, %s475
          %s477 = sadd.s32 %s25, %s24
          %s478 = smul.addr %s477, 128
          %s479 = scalar_lea.hbm %s2, %s478
          %s481 = sshll.u32 %s470, 4
          %s482 = int_to_ptr.vmem [resolvable:$true] %s481
          %484 = dma.vmem_to_hbm [thread:$0]  %s482, 128, %s479, %s467
        $region40: #{tpu_custom_call.1} parent=27 // pred_fallthru
          _
      $region28: #{tpu_custom_call.1} parent=5 // pred_fallthru
        _
      %p485 = scmp.le.s32.totalorder 2, %s15
      // Predicated region
      $region41: #{tpu_custom_call.1} parent=5 // pred_check
        %p486 = pneg %p485
      $region42: #{tpu_custom_call.1} parent=5 // pred_check_branch
        %488 = sbr.rel (%p486) target = $region44
      $region43: #{tpu_custom_call.1} parent=5 // pred_region
        %s489 = ssub.s32 %s15, 2
        // Predicated region
        $region45: #{tpu_custom_call.1} parent=43 // pred_check
          %p490 = pneg %p110
        $region46: #{tpu_custom_call.1} parent=43 // pred_check_branch
          %492 = sbr.rel (%p490) target = $region48
        $region47: #{tpu_custom_call.1} parent=43 // pred_region
          %s493 = sand.u32 %s95, 1
          %s494 = scalar_lea.sflag [#allocation5], %s493
          %s495 = sand.u32 %s95, 1
          %s496 = smul.addr %s495, 8
          %s497 = scalar_lea.vmem [#allocation8], %s496
          %498 = dma.done %s494, 128
        $region48: #{tpu_custom_call.1} parent=43 // pred_fallthru
          _
      $region44: #{tpu_custom_call.1} parent=5 // pred_fallthru
        _
    $region6: #{tpu_custom_call.1} parent=1 // loop_footer
      %s19 = sadd.s32 1, %s15
    $region7: #{tpu_custom_call.1} parent=1 // loop_footer_branch
      %14 = sbr.rel target = $region3
    $region8: #{tpu_custom_call.1} parent=1 // loop_exit
      _
    %499 = vsyncpa [#allocation4], 1
    %s500 = scalar_lea.sflag [#allocation4], 1
    %501 = vsyncpa %s500, 1
    %502 = vsyncpa [#allocation7], 1
    %503 = vsyncpa [#allocation5], 1
    %s504 = scalar_lea.sflag [#allocation5], 1
    %505 = vsyncpa %s504, 1

</llo_original>
